<compile_context>
chip_gen: v7x
topology: tpu7x:2x2x1
jax: 0.10.0
libtpu: 0.0.40
codegen_flags: <defaults>
</compile_context>

<pallas_src>
import functools

import jax
import jax.numpy as jnp
from jax import lax
from jax.experimental import pallas as pl
from jax.experimental.pallas import tpu as pltpu


def _mm_t_kernel(theta_ref, x_ref, o_ref):
    # theta_ref: (1, P), x_ref: (TILE_N, P), o_ref: (1, TILE_N)
    theta = theta_ref[...]
    x = x_ref[...]
    # Match torch semantics: x is up-cast to float32 (`.float()`), thetas stays
    # in its own (float32) dtype.  No-ops for the default f32 inputs; the cast
    # is VPU work hidden under the streaming DMA when x is narrow.
    if x.dtype != jnp.float32:
        x = x.astype(jnp.float32)
    if theta.dtype != jnp.float32:
        theta = theta.astype(jnp.float32)
    # thetas @ x.T, contracting the last dim of both operands -> (1, TILE_N).
    # No explicit transpose of the (TILE_N, P) tile; f32 accumulation on MXU.
    o_ref[...] = lax.dot_general(
        theta,
        x,
        dimension_numbers=(((1,), (1,)), ((), ())),
        preferred_element_type=jnp.float32,
    )


def _round_up(v, m):
    return (v + m - 1) // m * m


@functools.partial(jax.jit, static_argnames=("tn", "x_stream_budget_bytes"))
def model_forward(thetas, x, *, tn=None, x_stream_budget_bytes=8 * 1024 * 1024):
    """thetas: (1, P), x: (N, P) -> (1, N) float32  (== thetas @ x.T.float())."""
    n, p = x.shape
    assert thetas.shape == (1, p)

    x_itemsize = jnp.dtype(x.dtype).itemsize
    th_itemsize = jnp.dtype(thetas.dtype).itemsize

    # Largest row tile whose double-buffered copy fits the streaming budget
    # (default: ~4 MiB per tile, 8 MiB double-buffered), rounded down to a
    # multiple of 128 so the (1, TILE_N) output stores are lane-dense.
    max_tn = max(128, (x_stream_budget_bytes // (2 * p * x_itemsize)) // 128 * 128)
    if tn is None:
        # Keep >= ~8 grid steps so both v7x TensorCores get work and the
        # pipeline has enough iterations to hide DMA, but never shrink the
        # tile below 512 rows.
        step_cap = max(512, _round_up(pl.cdiv(n, 8), 128))
        tile_n = min(max_tn, step_cap)
    else:
        tile_n = min(tn, max_tn)
    # TODO(synk): for very large P where even a (128, P) tile exceeds the
    # budget, add a P-reduction ("arbitrary") grid axis with a (1, TILE_N) f32
    # accumulator scratch (and zero-mask padded K blocks); not needed here.

    if n <= tile_n:
        # Small input: one block whose shape equals the full array dims
        # (always a legal block shape), single grid step.
        tile_n = n
        grid = (1,)
    else:
        grid = (pl.cdiv(n, tile_n),)  # ragged tail handled by Pallas padding

    # Tie the tile-sizing math to the compiler's scoped-VMEM limit so larger
    # tiles compile on v5e (16 MiB default) / v6e (32 MiB) / v7x (32 MiB).
    vmem_bytes = (
        2 * tile_n * p * x_itemsize   # x double buffer
        + 2 * p * th_itemsize         # thetas buffers
        + 2 * tile_n * 4              # output double buffer (f32)
        + 4 * 1024 * 1024             # Mosaic internal scratch slack
    )
    vmem_bytes = int(min(max(vmem_bytes, 1 << 20), 32 * 1024 * 1024))

    cost = pl.CostEstimate(
        flops=2 * n * p,
        transcendentals=0,
        bytes_accessed=n * p * x_itemsize + p * th_itemsize + n * 4,
    )

    return pl.pallas_call(
        _mm_t_kernel,
        out_shape=jax.ShapeDtypeStruct((1, n), jnp.float32),
        grid=grid,
        in_specs=[
            pl.BlockSpec((1, p), lambda i: (0, 0)),        # thetas, resident
            pl.BlockSpec((tile_n, p), lambda i: (i, 0)),   # streamed x row tile
        ],
        out_specs=pl.BlockSpec((1, tile_n), lambda i: (0, i)),
        compiler_params=pltpu.CompilerParams(
            dimension_semantics=("parallel",),  # independent row tiles
            vmem_limit_bytes=vmem_bytes,
        ),
        cost_estimate=cost,
    )(thetas, x)


def _check(thetas, x, **kw):
    out = model_forward(thetas, x, **kw)
    jax.block_until_ready(out)
    ref = (thetas.astype(jnp.float32) @ x.T.astype(jnp.float32)).astype(jnp.float32)
    assert out.shape == ref.shape, (out.shape, ref.shape)
    assert jnp.allclose(out, ref, atol=1e-4, rtol=1e-4)
    return out


if __name__ == "__main__":
    key = jax.random.PRNGKey(0)
    k_theta, k_x, k_theta2, k_x2, k_x3 = jax.random.split(key, 5)

    # Shapes implied by the module: thetas (1, num_param), x (batch, num_param).
    num_param = 32
    batch = 8
    thetas = jax.random.normal(k_theta, (1, num_param), dtype=jnp.float32)
    x = jax.random.normal(k_x, (batch, num_param), dtype=jnp.float32)
    _check(thetas, x)

    # Larger shapes exercising the tiled / pipelined path (multiple grid steps,
    # auto tile sizing).
    p2, n2 = 256, 1024
    thetas2 = jax.random.normal(k_theta2, (1, p2), dtype=jnp.float32)
    x2 = jax.random.normal(k_x2, (n2, p2), dtype=jnp.float32)
    _check(thetas2, x2)

    # Ragged tail (N not a multiple of TILE_N) to exercise edge-block padding.
    x3 = jax.random.normal(k_x3, (600, p2), dtype=jnp.float32)
    _check(thetas2, x3)

    print("KERNEL_OK")
</pallas_src>

<mosaic_0001>
module attributes {stable_mosaic.version = 11 : i64} {
  func.func @_mm_t_kernel(%arg0: i32, %arg1: memref<1x32xf32, #tpu.memory_space<vmem>>, %arg2: memref<8x32xf32, #tpu.memory_space<vmem>>, %arg3: memref<1x8xf32, #tpu.memory_space<vmem>>) attributes {dimension_semantics = [#tpu.dimension_semantics<parallel>], iteration_bounds = array<i64: 1>, scalar_prefetch = 0 : i64, scratch_operands = 0 : i64, tpu.core_type = #tpu.core_type<tc>, window_params = [{pipeline_mode = #tpu.pipeline_mode<synchronous>, transform_indices = @transform_0, window_bounds = array<i64: 1, 32>}, {transform_indices = @transform_1, window_bounds = array<i64: 8, 32>}, {transform_indices = @transform_2, window_bounds = array<i64: 1, 8>}]} {
    %c0 = arith.constant 0 : index
    %c0_0 = arith.constant 0 : index
    %0 = vector.load %arg1[%c0, %c0_0] : memref<1x32xf32, #tpu.memory_space<vmem>>, vector<1x32xf32>
    %c0_1 = arith.constant 0 : index
    %c0_2 = arith.constant 0 : index
    %1 = vector.load %arg2[%c0_1, %c0_2] : memref<8x32xf32, #tpu.memory_space<vmem>>, vector<8x32xf32>
    %cst = arith.constant dense<0.000000e+00> : vector<1x8xf32>
    %2 = tpu.matmul %0, %1, %cst {dimension_numbers = #tpu.dot_dimension_numbers<[1], [1], [0], [0], [0, 0, 1, 0], [], []>} : vector<1x32xf32>, vector<8x32xf32>, vector<1x8xf32> -> vector<1x8xf32>
    %c0_3 = arith.constant 0 : index
    %c0_4 = arith.constant 0 : index
    %3 = vector.load %arg3[%c0_3, %c0_4] : memref<1x8xf32, #tpu.memory_space<vmem>>, vector<1x8xf32>
    tpu.vector_store %arg3[%c0_3, %c0_4], %2 {strides = array<i32>} : memref<1x8xf32, #tpu.memory_space<vmem>>, vector<1x8xf32>,
    return
  }
  func.func @transform_0(%arg0: i32) -> (i32, i32) {
    %c0_i32 = arith.constant 0 : i32
    %c0_i32_0 = arith.constant 0 : i32
    %c0_i32_1 = arith.constant 0 : i32
    return %c0_i32, %c0_i32_0 : i32, i32
  }
  func.func @transform_1(%arg0: i32) -> (i32, i32) {
    %c0_i32 = arith.constant 0 : i32
    %c0_i32_0 = arith.constant 0 : i32
    return %arg0, %c0_i32 : i32, i32
  }
  func.func @transform_2(%arg0: i32) -> (i32, i32) {
    %c0_i32 = arith.constant 0 : i32
    %c0_i32_0 = arith.constant 0 : i32
    return %c0_i32, %arg0 : i32, i32
  }
}

</mosaic_0001>

<llo_original>
// kernel: model_forward.1
$region0: #{model_forward.1}
  #allocation0 [shape = 'u32[]', space=smem, size = 0x4, offset = 0x4, fixed_abs, tag = 'smem constant byte address 0x4 - core index']
  #allocation1 [shape = 'u32[144,128]{1,0:T(1,128)}', space=vmem, size = 0x12000, scoped, tag = 'internal scratch']
  %s0 = inlined_call_operand.hbm [shape: f32[1,32], index: 0, kind: input, shape index: {}]
  %s1 = inlined_call_operand.hbm [shape: f32[8,32], index: 1, kind: input, shape index: {}]
  %s2 = inlined_call_operand.hbm [shape: f32[1,8], index: 2, kind: output, shape index: {}]
  %s3 = sld [smem:[#allocation0]]
  $region26: #{model_forward.1} parent=0
    _
  %s5 = ssub.s32 1, %s3
  %s6 = scalar_select 0, %s5, %s3
  $region1: #{model_forward.1} parent=0
    #allocation2 [shape = 'u8[512]{0}', space=vmem, size = 0x400, scoped, tag = 'input window, operand 0, single buffered']
    #allocation3 [shape = 's32[1]{0}', space=sflag, size = 0x4, scoped, tag = 'scoped memory for model_forward.1']
    #allocation4 [shape = 's32[1]{0}', space=sflag, size = 0x4, scoped, tag = 'scoped memory for model_forward.1']
    #allocation5 [shape = 'u8[4096]{0}', space=vmem, size = 0x1000, scoped, tag = 'input window, operand 1, single buffered']
    #allocation6 [shape = 's32[1]{0}', space=sflag, size = 0x4, scoped, tag = 'scoped memory for model_forward.1']
    #allocation7 [shape = 'u8[512]{0}', space=vmem, size = 0x400, scoped, tag = 'output window, operand 0, single buffered']
    %7 = vsyncpa [#allocation3], 0
    %8 = vsyncpa [#allocation6], 0
    %9 = vsyncpa [#allocation4], 0
    // Predicated region
    $region2: #{model_forward.1} parent=1 // pred_check
      _
    $region3: #{model_forward.1} parent=1 // pred_check_branch
      %11 = sbr.rel (0) target = $region5
    $region4: #{model_forward.1} parent=1 // pred_region
      %s13 = ssub.s32 16, 16
      %14 = vsyncadd [#allocation3], %s13
      %s16 = sshll.u32 [#allocation2], 4
      %s17 = int_to_ptr.vmem [resolvable:$true] %s16
      %19 = dma.hbm_to_vmem [thread:$0]  %s0, 16, %s17, [#allocation3]
    $region5: #{model_forward.1} parent=1 // pred_fallthru
      _
    // Predicated region
    $region6: #{model_forward.1} parent=1 // pred_check
      _
    $region7: #{model_forward.1} parent=1 // pred_check_branch
      %21 = sbr.rel (0) target = $region9
    $region8: #{model_forward.1} parent=1 // pred_region
      %s23 = ssub.s32 128, 128
      %24 = vsyncadd [#allocation6], %s23
      %s26 = sshll.u32 [#allocation5], 4
      %s27 = int_to_ptr.vmem [resolvable:$true] %s26
      %29 = dma.hbm_to_vmem [thread:$0]  %s1, 128, %s27, [#allocation6]
    $region9: #{model_forward.1} parent=1 // pred_fallthru
      _
    // Predicated region
    $region10: #{model_forward.1} parent=1 // pred_check
      _
    $region11: #{model_forward.1} parent=1 // pred_check_branch
      %31 = sbr.rel (0) target = $region13
    $region12: #{model_forward.1} parent=1 // pred_region
      %32 = dma.done [#allocation3], 16
    $region13: #{model_forward.1} parent=1 // pred_fallthru
      _
    // Predicated region
    $region14: #{model_forward.1} parent=1 // pred_check
      _
    $region15: #{model_forward.1} parent=1 // pred_check_branch
      %34 = sbr.rel (0) target = $region17
    $region16: #{model_forward.1} parent=1 // pred_region
      %35 = dma.done [#allocation6], 128
    $region17: #{model_forward.1} parent=1 // pred_fallthru
      _
    %v36 = vld [vmem:[#allocation2] sm:$0x1]
    %v37 = vld [vmem:[#allocation5] sm:$0xff]
    %vm38 = vcmask 261120
    %v40 = vsel %vm38, %v36, 0
    %v43 = vsel %vm38, %v37, 0
    %45 = vmatprep.subr.mxu0 0.0
    %46 = vmatpush1.xpose.msra.mxu0 %v43
    %47 = vmatprep.subr.mxu0 0.0
    %48 = vmatpush1.xpose.msra.mxu0 0.0
    %49 = vmatprep.subr.mxu0 0.0
    %50 = vmatpush1.xpose.msra.mxu0 0.0
    %51 = vmatprep.subr.mxu0 0.0
    %52 = vmatpush1.xpose.msra.mxu0 0.0
    %53 = vmatprep.subr.mxu0 0.0
    %54 = vmatpush1.xpose.msra.mxu0 0.0
    %55 = vmatprep.subr.mxu0 0.0
    %56 = vmatpush1.xpose.msra.mxu0 0.0
    %57 = vmatprep.subr.mxu0 0.0
    %58 = vmatpush1.xpose.msra.mxu0 0.0
    %59 = vmatprep.subr.mxu0 0.0
    %60 = vmatpush1.xpose.msra.mxu0 0.0
    %61 = vmatprep.subr.mxu0 0.0
    %62 = vmatpush1.xpose.msra.mxu0 0.0
    %63 = vmatprep.subr.mxu0 0.0
    %64 = vmatpush1.xpose.msra.mxu0 0.0
    %65 = vmatprep.subr.mxu0 0.0
    %66 = vmatpush1.xpose.msra.mxu0 0.0
    %67 = vmatprep.subr.mxu0 0.0
    %68 = vmatpush1.xpose.msra.mxu0 0.0
    %69 = vmatprep.subr.mxu0 0.0
    %70 = vmatpush1.xpose.msra.mxu0 0.0
    %71 = vmatprep.subr.mxu0 0.0
    %72 = vmatpush1.xpose.msra.mxu0 0.0
    %73 = vmatprep.subr.mxu0 0.0
    %74 = vmatpush1.xpose.msra.mxu0 0.0
    %75 = vmatprep.subr.mxu0 0.0
    %76 = vmatpush1.xpose.msra.mxu0 0.0
    %77 = vmatprep.subr.mxu0 0.0
    %78 = vmatpush1.xpose.msra.mxu0 0.0
    %79 = vmatprep.subr.mxu0 0.0
    %80 = vmatpush1.xpose.msra.mxu0 0.0
    %81 = vmatprep.subr.mxu0 0.0
    %82 = vmatpush1.xpose.msra.mxu0 0.0
    %83 = vmatprep.subr.mxu0 0.0
    %84 = vmatpush1.xpose.msra.mxu0 0.0
    %85 = vmatprep.subr.mxu0 0.0
    %86 = vmatpush1.xpose.msra.mxu0 0.0
    %87 = vmatprep.subr.mxu0 0.0
    %88 = vmatpush1.xpose.msra.mxu0 0.0
    %89 = vmatprep.subr.mxu0 0.0
    %90 = vmatpush1.xpose.msra.mxu0 0.0
    %91 = vmatprep.subr.mxu0 0.0
    %92 = vmatpush1.xpose.msra.mxu0 0.0
    %93 = vmatprep.subr.mxu0 0.0
    %94 = vmatpush1.xpose.msra.mxu0 0.0
    %95 = vmatprep.subr.mxu0 0.0
    %96 = vmatpush1.xpose.msra.mxu0 0.0
    %97 = vmatprep.subr.mxu0 0.0
    %98 = vmatpush1.xpose.msra.mxu0 0.0
    %99 = vmatprep.subr.mxu0 0.0
    %100 = vmatpush1.xpose.msra.mxu0 0.0
    %101 = vmatprep.subr.mxu0 0.0
    %102 = vmatpush1.xpose.msra.mxu0 0.0
    %103 = vmatprep.subr.mxu0 0.0
    %104 = vmatpush1.xpose.msra.mxu0 0.0
    %105 = vmatprep.subr.mxu0 0.0
    %106 = vmatpush1.xpose.msra.mxu0 0.0
    %107 = vmatprep.subr.mxu0 0.0
    %108 = vmatpush1.xpose.msra.mxu0 0.0
    %109 = vmatprep.mubr.f32.mxu0 0.0
    %110 = vmatmul.mubr.f32.gmra.mrb[0].mxu0 %v40
    %v111 = vpop.f32.mrb[0].mxu0
    %v112 = vadd.f32 0.0, %v111
    %v113 = vpop.f32.mrb[0].mxu0
    %114 = vdwg.mxu0
    %vm115 = vcmask 57344
    %116 = vst.msk [vmem:[#allocation7] sm:$0x1] %vm115, %v112
    // Predicated region
    $region18: #{model_forward.1} parent=1 // pred_check
      _
    $region19: #{model_forward.1} parent=1 // pred_check_branch
      %118 = sbr.rel (0) target = $region21
    $region20: #{model_forward.1} parent=1 // pred_region
      %s120 = ssub.s32 16, 16
      %121 = vsyncadd [#allocation4], %s120
      %s123 = sshll.u32 [#allocation7], 4
      %s124 = int_to_ptr.vmem [resolvable:$true] %s123
      %126 = dma.vmem_to_hbm [thread:$0]  %s124, 16, %s2, [#allocation4]
    $region21: #{model_forward.1} parent=1 // pred_fallthru
      _
    // Predicated region
    $region22: #{model_forward.1} parent=1 // pred_check
      _
    $region23: #{model_forward.1} parent=1 // pred_check_branch
      %128 = sbr.rel (0) target = $region25
    $region24: #{model_forward.1} parent=1 // pred_region
      %129 = dma.done [#allocation4], 16
    $region25: #{model_forward.1} parent=1 // pred_fallthru
      _
    %130 = vsyncpa [#allocation3], 1
    %131 = vsyncpa [#allocation6], 1
    %132 = vsyncpa [#allocation4], 1

</llo_original>
